<compile_context>
chip_gen: v7x
topology: tpu7x:2x2x1
jax: 0.10.0
libtpu: 0.0.40
codegen_flags: <defaults>
</compile_context>

<pallas_src>
import functools

import numpy as np
import jax
import jax.numpy as jnp
from jax.experimental import pallas as pl
from jax.experimental.pallas import tpu as pltpu

LANE = 128
MXU_ALIGN = 256   # full 256-wide MXU occupancy on v6e/v7x (128 suffices on v5e)


def _round_up(x, m):
    return (x + m - 1) // m * m


def _pad2(a, rows, cols, value=0.0):
    r, c = a.shape
    return jnp.pad(a, ((0, rows - r), (0, cols - c)), constant_values=value)


def _vmem_capacity_bytes():
    try:
        cap = getattr(pltpu.get_tpu_info(), "vmem_capacity_bytes", None)
        if cap:
            return int(cap)
    except Exception:
        pass
    return 64 * 1024 * 1024   # conservative (v7x-sized) fallback


# --------------------------------------------------------------------------- #
# Kernel: one grid step == one SAGE layer, activations carried in VMEM scratch #
# --------------------------------------------------------------------------- #
def sage_stack_kernel(a_hbm, x_hbm, wcat_ref, ss_ref, o_hbm,
                      a_vmem, act_ref, *, fmax, n_layers):
    # a_hbm:    (N, N)            bf16 row-normalized adjacency in HBM (pl.ANY)
    # x_hbm:    (N, fmax)         bf16 input features in HBM (pl.ANY)
    # wcat_ref: (1, fmax, 2*fmax) bf16 [Wl | Wr] for this layer (pipelined)
    # ss_ref:   (1, 2, fmax)      f32; row0 = folded BN scale, row1 = shift(+bias)
    # o_hbm:    (N, fmax)         bf16 output in HBM (pl.ANY), written on last layer
    # a_vmem:   (N, N)            bf16 single resident VMEM copy of A
    # act_ref:  (N, fmax)         bf16 activation scratch carried across layers
    layer = pl.program_id(0)

    @pl.when(layer == 0)
    def _():
        pltpu.sync_copy(a_hbm, a_vmem)    # A DMA'd once, reused by all L layers
        pltpu.sync_copy(x_hbm, act_ref)   # initial activations

    act = act_ref[...]                    # (N, fmax) bf16
    wcat = wcat_ref[0]                    # (fmax, 2*fmax) bf16
    ss = ss_ref[0]                        # (2, fmax) f32
    scale = ss[0:1, :]
    shift = ss[1:2, :]

    # Fused projection: single K=fmax MXU matmul producing [X@Wl | X@Wr].
    proj = jnp.dot(act, wcat, preferred_element_type=jnp.float32)   # (N, 2*fmax) f32
    y_nbr = proj[:, :fmax].astype(jnp.bfloat16)      # neighbor branch, bf16 for MXU
    y_self = proj[:, fmax:]                          # self/root branch, f32

    # Mean aggregation, restructured as A @ (X @ Wl).
    agg = jnp.dot(a_vmem[...], y_nbr, preferred_element_type=jnp.float32)

    h = agg + y_self
    # Eval-mode BatchNorm (with folded conv bias) as per-feature affine.
    h = h * scale + shift

    @pl.when(layer < n_layers - 1)
    def _():
        # ReLU; dropout is identity in eval mode.
        act_ref[...] = jnp.maximum(h, 0.0).astype(act_ref.dtype)

    @pl.when(layer == n_layers - 1)
    def _():
        # Stage the final output through the activation scratch (bf16) and DMA
        # it to HBM: zero extra output VMEM, half the writeback bytes.
        act_ref[...] = h.astype(act_ref.dtype)
        pltpu.sync_copy(act_ref, o_hbm)


# --------------------------------------------------------------------------- #
# Host-side parameter packing and wrapper                                      #
# --------------------------------------------------------------------------- #
def pack_params(layers, fmax):
    """Pad params to fmax, fuse [Wl|Wr], fold bias into BN, merge scale/shift."""
    wcats, affines = [], []
    for p in layers:
        wl = _pad2(p["wl"], fmax, fmax)
        wr = _pad2(p["wr"], fmax, fmax)
        wcats.append(jnp.concatenate([wl, wr], axis=1))            # (fmax, 2*fmax)
        shift_folded = p["b"] * p["scale"] + p["shift"]            # fold conv bias
        scale_pad = _pad2(p["scale"], 1, fmax, value=1.0)          # padded lanes stay 0
        shift_pad = _pad2(shift_folded, 1, fmax, value=0.0)
        affines.append(jnp.concatenate([scale_pad, shift_pad], axis=0))  # (2, fmax)
    wcat = jnp.stack(wcats).astype(jnp.bfloat16)                   # (L, fmax, 2*fmax)
    ss = jnp.stack(affines).astype(jnp.float32)                    # (L, 2, fmax)
    return wcat, ss


def sage_forward(x, adj, layers):
    N, fin = x.shape
    L = len(layers)
    fout_last = layers[-1]["wl"].shape[1]
    fmax = _round_up(max([fin] + [p["wl"].shape[1] for p in layers]), LANE)
    n_pad = _round_up(N, MXU_ALIGN)     # padded rows/cols are zero -> no effect

    # Per-generation VMEM budget (v5e/v6e: 128 MiB, v7x: 64 MiB physical).
    vmem_cap = _vmem_capacity_bytes()
    vmem_limit = int(vmem_cap * 0.9)
    # Fused design keeps A (single copy) + activations VMEM resident.
    est_vmem = (n_pad * n_pad * 2              # A, bf16, single VMEM copy
                + n_pad * fmax * 2             # carried activations, bf16
                + 2 * fmax * 2 * fmax * 2      # [Wl|Wr], bf16, double-buffered
                + 2 * 8 * fmax * 4)            # scale/shift, f32, (8,128)-tile padded, x2
    assert est_vmem < int(vmem_cap * 0.78), (
        "fused SAGE kernel exceeds the VMEM budget at this size; "
        "a CSR/gather (scalar-prefetch) variant is needed")

    wcat, ss = pack_params(layers, fmax)
    a_pad = _pad2(adj, n_pad, n_pad).astype(jnp.bfloat16)
    x_pad = _pad2(x, n_pad, fmax).astype(jnp.bfloat16)

    kernel = functools.partial(sage_stack_kernel, fmax=fmax, n_layers=L)
    out = pl.pallas_call(
        kernel,
        out_shape=jax.ShapeDtypeStruct((n_pad, fmax), jnp.bfloat16),
        grid_spec=pltpu.PrefetchScalarGridSpec(
            num_scalar_prefetch=0,
            grid=(L,),
            in_specs=[
                pl.BlockSpec(memory_space=pl.ANY),                       # A (DMA'd once)
                pl.BlockSpec(memory_space=pl.ANY),                       # X0 (DMA'd once)
                pl.BlockSpec((1, fmax, 2 * fmax), lambda l: (l, 0, 0)),  # [Wl|Wr] per layer
                pl.BlockSpec((1, 2, fmax), lambda l: (l, 0, 0)),         # BN scale/shift
            ],
            out_specs=pl.BlockSpec(memory_space=pl.ANY),                 # written via DMA
            scratch_shapes=[
                pltpu.VMEM((n_pad, n_pad), jnp.bfloat16),                # resident A
                pltpu.VMEM((n_pad, fmax), jnp.bfloat16),                 # carried activations
            ],
        ),
        compiler_params=pltpu.CompilerParams(
            dimension_semantics=("arbitrary",),   # layers are sequentially dependent
            vmem_limit_bytes=vmem_limit,
        ),
    )(a_pad, x_pad, wcat, ss)
    return out[:N, :fout_last].astype(jnp.float32)


# --------------------------------------------------------------------------- #
# References                                                                   #
# --------------------------------------------------------------------------- #
def sage_reference_f32(x, adj, layers):
    """Pure-f32 reference matching the PyTorch module's eval-mode forward."""
    L = len(layers)
    h = x
    for li, p in enumerate(layers):
        h_new = adj @ h @ p["wl"] + h @ p["wr"] + p["b"]
        if li < L - 1:
            h_new = h_new * p["scale"] + p["shift"]
            h_new = jnp.maximum(h_new, 0.0)
        h = h_new
    return h


def sage_reference_mixed(x, adj, layers):
    """Reference with the same bf16 cast points / restructuring as the kernel."""
    N, fin = x.shape
    L = len(layers)
    fout_last = layers[-1]["wl"].shape[1]
    fmax = _round_up(max([fin] + [p["wl"].shape[1] for p in layers]), LANE)
    wcat, ss = pack_params(layers, fmax)
    a = adj.astype(jnp.bfloat16)
    act = _pad2(x, N, fmax).astype(jnp.bfloat16)
    h = None
    for l in range(L):
        proj = jnp.dot(act, wcat[l], preferred_element_type=jnp.float32)
        agg = jnp.dot(a, proj[:, :fmax].astype(jnp.bfloat16),
                      preferred_element_type=jnp.float32)
        h = agg + proj[:, fmax:]
        h = h * ss[l, 0:1, :] + ss[l, 1:2, :]
        if l < L - 1:
            act = jnp.maximum(h, 0.0).astype(jnp.bfloat16)
    h = h.astype(jnp.bfloat16).astype(jnp.float32)   # kernel emits bf16 output
    return h[:, :fout_last]


def init_params(key, in_channels, hidden_channels, num_layers):
    two_h = 2 * hidden_channels
    layer_dims = ([(in_channels, two_h)]
                  + [(two_h, two_h)] * (num_layers - 2)
                  + [(two_h, hidden_channels)])
    eps = 1e-5
    layers = []
    for li, (fin, fout) in enumerate(layer_dims):
        key, k1, k2, k3, k4, k5, k6, k7 = jax.random.split(key, 8)
        wl = jax.random.normal(k1, (fin, fout), jnp.float32) / jnp.sqrt(fin)
        wr = jax.random.normal(k2, (fin, fout), jnp.float32) / jnp.sqrt(fin)
        b = 0.1 * jax.random.normal(k3, (1, fout), jnp.float32)
        if li < num_layers - 1:
            gamma = 1.0 + 0.1 * jax.random.normal(k4, (1, fout), jnp.float32)
            beta = 0.1 * jax.random.normal(k5, (1, fout), jnp.float32)
            r_mean = 0.1 * jax.random.normal(k6, (1, fout), jnp.float32)
            r_var = 1.0 + 0.1 * jnp.abs(jax.random.normal(k7, (1, fout), jnp.float32))
            scale = gamma / jnp.sqrt(r_var + eps)
            shift = beta - r_mean * scale
        else:
            scale = jnp.ones((1, fout), jnp.float32)
            shift = jnp.zeros((1, fout), jnp.float32)
        layers.append(dict(wl=wl, wr=wr, b=b, scale=scale, shift=shift))
    return layers


if __name__ == "__main__":
    key = jax.random.PRNGKey(0)
    N = 256               # number of nodes
    in_channels = 128
    hidden_channels = 64  # layer widths: 128 -> 128 -> 128 -> 64 (padded to 128 in-kernel)
    num_layers = 3
    dropout = 0.5         # identity in eval mode

    key, kx, ka = jax.random.split(key, 3)
    x = jax.random.normal(kx, (N, in_channels), jnp.float32)

    # random sparse-ish adjacency, zero diagonal, row-normalized (mean aggregation)
    a_raw = (jax.random.uniform(ka, (N, N)) < 0.05).astype(jnp.float32)
    a_raw = a_raw * (1.0 - jnp.eye(N, dtype=jnp.float32))
    deg = a_raw.sum(axis=1, keepdims=True)
    adj = a_raw / jnp.where(deg > 0, deg, 1.0)

    layers = init_params(key, in_channels, hidden_channels, num_layers)

    out = sage_forward(x, adj, layers)
    out = jax.block_until_ready(out)
    assert out.shape == (N, hidden_channels)

    # 1) Tight check vs a reference using identical bf16 cast points
    #    (tolerance accounts for the bf16 final-output rounding).
    ref_mixed = sage_reference_mixed(x, adj, layers)
    np.testing.assert_allclose(np.asarray(out), np.asarray(ref_mixed),
                               rtol=1e-2, atol=1e-2)

    # 2) Semantic sanity vs the pure-f32 module forward (bf16 drift only).
    ref_f32 = np.asarray(sage_reference_f32(x, adj, layers))
    rel_err = np.linalg.norm(np.asarray(out) - ref_f32) / np.linalg.norm(ref_f32)
    assert rel_err < 0.05, f"mixed-precision drift too large: {rel_err}"

    print("KERNEL_OK")
</pallas_src>

<mosaic_0001>
module attributes {stable_mosaic.version = 11 : i64} {
  func.func @sage_stack_kernel(%arg0: i32, %arg1: memref<256x256xbf16, #tpu.memory_space<any>>, %arg2: memref<256x128xbf16, #tpu.memory_space<any>>, %arg3: memref<1x128x256xbf16, #tpu.memory_space<vmem>>, %arg4: memref<1x2x128xf32, #tpu.memory_space<vmem>>, %arg5: memref<256x128xbf16, #tpu.memory_space<any>>, %arg6: memref<256x256xbf16, #tpu.memory_space<vmem>>, %arg7: memref<256x128xbf16, #tpu.memory_space<vmem>>) attributes {dimension_semantics = [#tpu.dimension_semantics<arbitrary>], iteration_bounds = array<i64: 3>, scalar_prefetch = 0 : i64, scratch_operands = 2 : i64, tpu.core_type = #tpu.core_type<tc>, window_params = [{}, {}, {transform_indices = @transform_2, window_bounds = array<i64: 1, 128, 256>}, {transform_indices = @transform_3, window_bounds = array<i64: 1, 2, 128>}, {}]} {
    %c0_i32 = arith.constant 0 : i32
    %0 = arith.cmpi eq, %arg0, %c0_i32 : i32
    %1 = arith.extui %0 : i1 to i32
    %c0_i32_0 = arith.constant 0 : i32
    %2 = arith.cmpi ne, %1, %c0_i32_0 : i32
    scf.if %2 {
      "tpu.region"() ({
        %27 = tpu.sem_alloc : memref<!tpu.dma_semaphore, #tpu.memory_space<semaphore_mem>>
        tpu.enqueue_dma source(%arg1 : memref<256x256xbf16, #tpu.memory_space<any>>) target(%arg6 : memref<256x256xbf16, #tpu.memory_space<vmem>>) target_semaphore(%27 : memref<!tpu.dma_semaphore, #tpu.memory_space<semaphore_mem>>)
        tpu.wait_dma2 semaphore(%27 : memref<!tpu.dma_semaphore, #tpu.memory_space<semaphore_mem>>) src(%arg1 : memref<256x256xbf16, #tpu.memory_space<any>>) dst(%arg6 : memref<256x256xbf16, #tpu.memory_space<vmem>>)
        tpu.yield
      }) : () -> ()
      "tpu.region"() ({
        %27 = tpu.sem_alloc : memref<!tpu.dma_semaphore, #tpu.memory_space<semaphore_mem>>
        tpu.enqueue_dma source(%arg2 : memref<256x128xbf16, #tpu.memory_space<any>>) target(%arg7 : memref<256x128xbf16, #tpu.memory_space<vmem>>) target_semaphore(%27 : memref<!tpu.dma_semaphore, #tpu.memory_space<semaphore_mem>>)
        tpu.wait_dma2 semaphore(%27 : memref<!tpu.dma_semaphore, #tpu.memory_space<semaphore_mem>>) src(%arg2 : memref<256x128xbf16, #tpu.memory_space<any>>) dst(%arg7 : memref<256x128xbf16, #tpu.memory_space<vmem>>)
        tpu.yield
      }) : () -> ()
    } else {
    }
    %c0 = arith.constant 0 : index
    %c0_1 = arith.constant 0 : index
    %3 = vector.load %arg7[%c0, %c0_1] : memref<256x128xbf16, #tpu.memory_space<vmem>>, vector<256x128xbf16>
    %c0_2 = arith.constant 0 : index
    %c0_3 = arith.constant 0 : index
    %c0_4 = arith.constant 0 : index
    %4 = vector.load %arg3[%c0_2, %c0_3, %c0_4] : memref<1x128x256xbf16, #tpu.memory_space<vmem>>, vector<1x128x256xbf16>
    %5 = vector.shape_cast %4 : vector<1x128x256xbf16> to vector<128x256xbf16>
    %c0_5 = arith.constant 0 : index
    %c0_6 = arith.constant 0 : index
    %c0_7 = arith.constant 0 : index
    %6 = vector.load %arg4[%c0_5, %c0_6, %c0_7] : memref<1x2x128xf32, #tpu.memory_space<vmem>>, vector<1x2x128xf32>
    %7 = vector.shape_cast %6 : vector<1x2x128xf32> to vector<2x128xf32>
    %8 = vector.extract_strided_slice %7 {offsets = [0, 0], sizes = [1, 128], strides = [1, 1]} : vector<2x128xf32> to vector<1x128xf32>
    %9 = vector.extract_strided_slice %7 {offsets = [1, 0], sizes = [1, 128], strides = [1, 1]} : vector<2x128xf32> to vector<1x128xf32>
    %cst = arith.constant dense<0.000000e+00> : vector<256x256xf32>
    %10 = tpu.matmul %3, %5, %cst {dimension_numbers = #tpu.dot_dimension_numbers<[1], [0], [0], [1], [0, 0, 1, 1], [], []>} : vector<256x128xbf16>, vector<128x256xbf16>, vector<256x256xf32> -> vector<256x256xf32>
    %11 = vector.extract_strided_slice %10 {offsets = [0, 0], sizes = [256, 128], strides = [1, 1]} : vector<256x256xf32> to vector<256x128xf32>
    %12 = arith.truncf %11 : vector<256x128xf32> to vector<256x128xbf16>
    %13 = vector.extract_strided_slice %10 {offsets = [0, 128], sizes = [256, 128], strides = [1, 1]} : vector<256x256xf32> to vector<256x128xf32>
    %c0_8 = arith.constant 0 : index
    %c0_9 = arith.constant 0 : index
    %14 = vector.load %arg6[%c0_8, %c0_9] : memref<256x256xbf16, #tpu.memory_space<vmem>>, vector<256x256xbf16>
    %cst_10 = arith.constant dense<0.000000e+00> : vector<256x128xf32>
    %15 = tpu.matmul %14, %12, %cst_10 {dimension_numbers = #tpu.dot_dimension_numbers<[1], [0], [0], [1], [0, 0, 1, 1], [], []>} : vector<256x256xbf16>, vector<256x128xbf16>, vector<256x128xf32> -> vector<256x128xf32>
    %16 = arith.addf %15, %13 : vector<256x128xf32>
    %17 = vector.broadcast %8 : vector<1x128xf32> to vector<256x128xf32>
    %18 = arith.mulf %16, %17 : vector<256x128xf32>
    %19 = vector.broadcast %9 : vector<1x128xf32> to vector<256x128xf32>
    %20 = arith.addf %18, %19 : vector<256x128xf32>
    %c2_i32 = arith.constant 2 : i32
    %21 = arith.cmpi slt, %arg0, %c2_i32 : i32
    %22 = arith.extui %21 : i1 to i32
    %c0_i32_11 = arith.constant 0 : i32
    %23 = arith.cmpi ne, %22, %c0_i32_11 : i32
    scf.if %23 {
      %cst_14 = arith.constant 0.000000e+00 : f32
      %27 = vector.broadcast %cst_14 : f32 to vector<256x128xf32>
      %28 = arith.maximumf %20, %27 : vector<256x128xf32>
      %29 = arith.truncf %28 : vector<256x128xf32> to vector<256x128xbf16>
      %c0_15 = arith.constant 0 : index
      %c0_16 = arith.constant 0 : index
      %30 = vector.load %arg7[%c0_15, %c0_16] : memref<256x128xbf16, #tpu.memory_space<vmem>>, vector<256x128xbf16>
      tpu.vector_store %arg7[%c0_15, %c0_16], %29 {strides = array<i32>} : memref<256x128xbf16, #tpu.memory_space<vmem>>, vector<256x128xbf16>,
    } else {
    }
    %c2_i32_12 = arith.constant 2 : i32
    %24 = arith.cmpi eq, %arg0, %c2_i32_12 : i32
    %25 = arith.extui %24 : i1 to i32
    %c0_i32_13 = arith.constant 0 : i32
    %26 = arith.cmpi ne, %25, %c0_i32_13 : i32
    scf.if %26 {
      %27 = arith.truncf %20 : vector<256x128xf32> to vector<256x128xbf16>
      %c0_14 = arith.constant 0 : index
      %c0_15 = arith.constant 0 : index
      %28 = vector.load %arg7[%c0_14, %c0_15] : memref<256x128xbf16, #tpu.memory_space<vmem>>, vector<256x128xbf16>
      tpu.vector_store %arg7[%c0_14, %c0_15], %27 {strides = array<i32>} : memref<256x128xbf16, #tpu.memory_space<vmem>>, vector<256x128xbf16>,
      "tpu.region"() ({
        %29 = tpu.sem_alloc : memref<!tpu.dma_semaphore, #tpu.memory_space<semaphore_mem>>
        tpu.enqueue_dma source(%arg7 : memref<256x128xbf16, #tpu.memory_space<vmem>>) target(%arg5 : memref<256x128xbf16, #tpu.memory_space<any>>) target_semaphore(%29 : memref<!tpu.dma_semaphore, #tpu.memory_space<semaphore_mem>>)
        tpu.wait_dma2 semaphore(%29 : memref<!tpu.dma_semaphore, #tpu.memory_space<semaphore_mem>>) src(%arg7 : memref<256x128xbf16, #tpu.memory_space<vmem>>) dst(%arg5 : memref<256x128xbf16, #tpu.memory_space<any>>)
        tpu.yield
      }) : () -> ()
    } else {
    }
    return
  }
  func.func @transform_2(%arg0: i32) -> (i32, i32, i32) {
    %c0_i32 = arith.constant 0 : i32
    %c0_i32_0 = arith.constant 0 : i32
    %c0_i32_1 = arith.constant 0 : i32
    return %arg0, %c0_i32, %c0_i32_0 : i32, i32, i32
  }
  func.func @transform_3(%arg0: i32) -> (i32, i32, i32) {
    %c0_i32 = arith.constant 0 : i32
    %c0_i32_0 = arith.constant 0 : i32
    %c0_i32_1 = arith.constant 0 : i32
    return %arg0, %c0_i32, %c0_i32_0 : i32, i32, i32
  }
}

</mosaic_0001>

<llo_original>
// kernel: tpu_custom_call.1
$region0: #{tpu_custom_call.1}
  #allocation0 [shape = 'u32[]', space=smem, size = 0x4, offset = 0x4, fixed_abs, tag = 'smem constant byte address 0x4 - core index']
  #allocation1 [shape = 'u32[144,128]{1,0:T(1,128)}', space=vmem, size = 0x12000, scoped, tag = 'internal scratch']
  #allocation2 [shape = 'bf16[256,256]{1,0:T(16,128)(2,1)}', space=vmem, size = 0x20000, scoped, tag = 'scratch operand']
  #allocation3 [shape = 'bf16[256,128]{1,0:T(16,128)(2,1)}', space=vmem, size = 0x10000, scoped, tag = 'scratch operand']
  #allocation7 [shape = 's32[]', space=sflag, size = 0x4, offset = 0, fixed_abs, tag = 'sflag constant byte address 0x0 - dummy sync flag']
  #allocation10 [shape = 's32[]', space=sflag, size = 0x4, offset = 0, fixed_abs, tag = 'sflag constant byte address 0x0 - dummy sync flag']
  #allocation11 [shape = 's32[]', space=sflag, size = 0x4, offset = 0, fixed_abs, tag = 'sflag constant byte address 0x0 - dummy sync flag']
  #allocation12 [shape = 'u32[]', space=smem, size = 0x4, offset = 0x44, fixed_abs, tag = 'smem constant byte address 0x44 - assertion arg 0']
  #allocation13 [shape = 'u32[]', space=smem, size = 0x4, offset = 0x48, fixed_abs, tag = 'smem constant byte address 0x48 - assertion arg 1']
  #allocation15 [shape = 's32[]', space=sflag, size = 0x4, offset = 0, fixed_abs, tag = 'sflag constant byte address 0x0 - dummy sync flag']
  #allocation16 [shape = 's32[]', space=sflag, size = 0x4, offset = 0, fixed_abs, tag = 'sflag constant byte address 0x0 - dummy sync flag']
  %s0 = inlined_call_operand.hbm [shape: bf16[256,256], index: 0, kind: input, shape index: {}]
  %s1 = inlined_call_operand.hbm [shape: bf16[256,128], index: 1, kind: input, shape index: {}]
  %s2 = inlined_call_operand.hbm [shape: bf16[3,128,256], index: 2, kind: input, shape index: {}]
  %s3 = inlined_call_operand.vmem [shape: f32[3,2,128], index: 3, kind: input, shape index: {}]
  %s4 = inlined_call_operand.hbm [shape: bf16[256,128], index: 4, kind: output, shape index: {}]
  %s5 = sld [smem:[#allocation0]]
  $region56: #{tpu_custom_call.1} parent=0
    _
  %s7 = ssub.s32 1, %s5
  %s8 = scalar_select 0, %s7, %s5
  $region1: #{tpu_custom_call.1} parent=0
    #allocation4 [shape = 'u8[131072]{0}', space=vmem, size = 0x20000, scoped, tag = 'input window, operand 2']
    #allocation5 [shape = 's32[2]{0}', space=sflag, size = 0x8, scoped, tag = 'scoped memory for tpu_custom_call.1']
    %9 = vsyncpa [#allocation5], 0
    %s10 = scalar_lea.sflag [#allocation5], 1
    %11 = vsyncpa %s10, 0
    loop: start=0, step=1, limit=4
    $region2: #{tpu_custom_call.1} parent=1 // loop_pre_header
      _
    $region3: #{tpu_custom_call.1} parent=1 // loop_header
      %s13 = sphi 0, %s17
      %p14 = scmp.ge.s32.totalorder %s13, 4
      %s22 = sphi 0, %s24
      %s25 = sphi 0, %s22
      %s35 = sphi 0, %s25
      %s41 = sphi 0, %s43
      %s44 = sphi 0, %s41
      %s54 = sphi 0, %s44
    $region4: #{tpu_custom_call.1} parent=1 // loop_header_branch
      %16 = sbr.rel (%p14) target = $region8
    $region5: #{tpu_custom_call.1} parent=1 // loop_body
      %s18 = ssub.s32 %s13, 1
      %s19 = sadd.s32 %s13, 1
      %s20 = ssub.s32 %s13, %s19
      %p21 = scmp.eq.s32.totalorder %s20, 0
      %s23 = sadd.s32 %s22, 1
      %s24 = scalar_select %p21, %s22, %s23
      %p26 = pneg %p21
      %p27 = scmp.eq.s32.totalorder %s13, 2
      %p28 = por %p26, %p27
      %p29 = scmp.ne.s32.totalorder %s22, %s25
      %p30 = scmp.eq.s32.totalorder %s13, 0
      %p31 = por %p29, %p30
      %p32 = scmp.ne.s32.totalorder %s22, %s25
      %p33 = scmp.eq.s32.totalorder %s18, 2
      %p34 = por %p32, %p33
      %p36 = scmp.ne.s32.totalorder %s25, %s35
      %p37 = scmp.eq.s32.totalorder %s18, 0
      %p38 = por %p36, %p37
      %s39 = ssub.s32 %s13, %s19
      %p40 = scmp.eq.s32.totalorder %s39, 0
      %s42 = sadd.s32 %s41, 1
      %s43 = scalar_select %p40, %s41, %s42
      %p45 = pneg %p40
      %p46 = scmp.eq.s32.totalorder %s13, 2
      %p47 = por %p45, %p46
      %p48 = scmp.ne.s32.totalorder %s41, %s44
      %p49 = scmp.eq.s32.totalorder %s13, 0
      %p50 = por %p48, %p49
      %p51 = scmp.ne.s32.totalorder %s41, %s44
      %p52 = scmp.eq.s32.totalorder %s18, 2
      %p53 = por %p51, %p52
      %p55 = scmp.ne.s32.totalorder %s44, %s54
      %p56 = scmp.eq.s32.totalorder %s18, 0
      %p57 = por %p55, %p56
      %p58 = scmp.le.s32.totalorder 1, %s13
      // Predicated region
      $region9: #{tpu_custom_call.1} parent=5 // pred_check
        %p59 = pneg %p58
      $region10: #{tpu_custom_call.1} parent=5 // pred_check_branch
        %61 = sbr.rel (%p59) target = $region12
      $region11: #{tpu_custom_call.1} parent=5 // pred_region
        %s62 = ssub.s32 %s13, 1
      $region12: #{tpu_custom_call.1} parent=5 // pred_fallthru
        _
      %p63 = scmp.lt.s32.totalorder %s13, 3
      // Predicated region
      $region13: #{tpu_custom_call.1} parent=5 // pred_check
        %p64 = pneg %p63
      $region14: #{tpu_custom_call.1} parent=5 // pred_check_branch
        %66 = sbr.rel (%p64) target = $region16
      $region15: #{tpu_custom_call.1} parent=5 // pred_region
        // Predicated region
        $region17: #{tpu_custom_call.1} parent=15 // pred_check
          %p67 = pneg %p31
        $region18: #{tpu_custom_call.1} parent=15 // pred_check_branch
          %69 = sbr.rel (%p67) target = $region20
        $region19: #{tpu_custom_call.1} parent=15 // pred_region
          %s70 = sand.u32 %s22, 1
          %s71 = scalar_lea.sflag [#allocation5], %s70
          %s72 = sand.u32 %s22, 1
          %s73 = smul.addr %s72, 128
          %s74 = scalar_lea.vmem [#allocation4], %s73
          %s76 = ssub.s32 2048, 2048
          %77 = vsyncadd %s71, %s76
          %s78 = smul.addr %s13, 32
          %s79 = smul.addr %s78, 64
          %s80 = scalar_lea.hbm %s2, %s79
          %s81 = sshll.u32 %s74, 4
          %s82 = int_to_ptr.vmem [resolvable:$true] %s81
          %87 = dma.hbm_to_vmem [thread:$0]  %s80, 2048, %s82, %s71, 128, 128, 8
        $region20: #{tpu_custom_call.1} parent=15 // pred_fallthru
          _
        // Predicated region
        $region21: #{tpu_custom_call.1} parent=15 // pred_check
          %p88 = pneg %p50
        $region22: #{tpu_custom_call.1} parent=15 // pred_check_branch
          %90 = sbr.rel (%p88) target = $region24
        $region23: #{tpu_custom_call.1} parent=15 // pred_region
          %p91 = scmp.lt.s32.totalorder %s13, 2
          %s92 = scalar_select %p91, %s13, 2
          %s93 = smul.addr %s92, 2
          %s94 = scalar_lea.vmem %s3, %s93
        $region24: #{tpu_custom_call.1} parent=15 // pred_fallthru
          _
      $region16: #{tpu_custom_call.1} parent=5 // pred_fallthru
        _
      %p95 = scmp.le.s32.totalorder 1, %s13
      // Predicated region
      $region25: #{tpu_custom_call.1} parent=5 // pred_check
        %p96 = pneg %p95
      $region26: #{tpu_custom_call.1} parent=5 // pred_check_branch
        %98 = sbr.rel (%p96) target = $region28
      $region27: #{tpu_custom_call.1} parent=5 // pred_region
        %s99 = ssub.s32 %s13, 1
        %s100 = sand.u32 %s25, 1
        %s101 = scalar_lea.sflag [#allocation5], %s100
        %s102 = sand.u32 %s25, 1
        %s103 = smul.addr %s102, 128
        %s104 = scalar_lea.vmem [#allocation4], %s103
        // Predicated region
        $region29: #{tpu_custom_call.1} parent=27 // pred_check
          %p105 = pneg %p38
        $region30: #{tpu_custom_call.1} parent=27 // pred_check_branch
          %107 = sbr.rel (%p105) target = $region32
        $region31: #{tpu_custom_call.1} parent=27 // pred_region
          %108 = dma.done %s101, 2048
        $region32: #{tpu_custom_call.1} parent=27 // pred_fallthru
          _
        %s109 = sand.u32 %s25, 1
        %s110 = scalar_lea.sflag [#allocation5], %s109
        %s111 = sand.u32 %s25, 1
        %s112 = smul.addr %s111, 128
        %s113 = scalar_lea.vmem [#allocation4], %s112
        %p114 = pneg %p38
        %p115 = pneg %p34
        %p116 = scmp.lt.s32.totalorder %s18, 2
        %s117 = scalar_select %p116, %s18, 2
        %s118 = smul.addr %s117, 2
        %s119 = scalar_lea.vmem %s3, %s118
        %p120 = pneg %p57
        %p121 = pneg %p53
        %p122 = scmp.lt.s32.totalorder %s18, 2
        %s123 = scalar_select %p122, %s18, 2
        %s124 = smul.addr %s123, 2
        %s125 = scalar_lea.vmem %s3, %s124
        %p127 = scmp.eq.s32.totalorder %s18, 0
        // Predicated region
        $region33: #{tpu_custom_call.1} parent=27 // pred_check
          %p128 = pneg %p127
        $region34: #{tpu_custom_call.1} parent=27 // pred_check_branch
          %130 = sbr.rel (%p128) target = $region36
        $region35: #{tpu_custom_call.1} parent=27 // pred_region
          $region37: #{tpu_custom_call.1} parent=35
            #allocation6 [shape = 's32[1]{0}', space=sflag, size = 0x4, scoped, tag = 'scoped memory for tpu_custom_call.1']
            #allocation8 [shape = 'u32[9]{0}', space=smem, size = 0x24, scoped, tag = 'DMA stride descriptor']
            %s132 = sshll.u32 1, 14
            %s133 = sxor.u32 4294967295, %s132
            %s135 = sld [smem:[#allocation0]]
            %s136 = sadd.s32 2, %s135
            %s138 = sshll.u32 7, 26
            %s139 = sxor.u32 4294967295, %s138
            %s140 = sand.u32 0, %s139
            %s141 = sshll.u32 %s136, 26
            %s142 = sor.u32 %s140, %s141
            %s143 = sshll.u32 [#allocation2], 4
            %s144 = int_to_ptr.vmem [resolvable:$true] %s143
            %147 = sst [smem:[#allocation8]] 256
            %s148 = scalar_lea.smem [#allocation8], 1
            %149 = sst [smem:[%s148]] 256
            %s150 = scalar_lea.smem [#allocation8], 2
            %151 = sst [smem:[%s150]] 2
            %s152 = scalar_lea.smem [#allocation8], 3
            %153 = sst [smem:[%s152]] 64
            %s154 = scalar_lea.smem [#allocation8], 4
            %155 = sst [smem:[%s154]] 128
            %s156 = scalar_lea.smem [#allocation8], 5
            %157 = sst [smem:[%s156]] 2
            %s158 = scalar_lea.smem [#allocation8], 6
            %159 = sst [smem:[%s158]] 128
            %s160 = scalar_lea.smem [#allocation8], 7
            %161 = sst [smem:[%s160]] 64
            %s162 = scalar_lea.smem [#allocation8], 8
            %163 = sst [smem:[%s162]] 4
            %165 = dma.general %s0, 4096, %s144, [#allocation6], [#allocation7], [#allocation8], %s142, 0
            %s166 = smul.u32 4, 32
            %s167 = smul.u32 %s166, 2
            %s168 = sshll.u32 %s167, 4
            %169 = dma.done [#allocation6], %s168
          $region38: #{tpu_custom_call.1} parent=35
            #allocation9 [shape = 's32[1]{0}', space=sflag, size = 0x4, scoped, tag = 'scoped memory for tpu_custom_call.1']
            // Predicated region
            $region39: #{tpu_custom_call.1} parent=38 // pred_check
              _
            $region40: #{tpu_custom_call.1} parent=38 // pred_check_branch
              %171 = sbr.rel target = $region42
            $region41: #{tpu_custom_call.1} parent=38 // pred_region
              %172 = sst [smem:[#allocation12]] [#allocation11]
              %173 = sst [smem:[#allocation13]] [#allocation10]
            $region42: #{tpu_custom_call.1} parent=38 // pred_fallthru
              _
            %175 = shalt.err (0)
            %s177 = sshll.u32 [#allocation3], 4
            %s178 = int_to_ptr.vmem [resolvable:$true] %s177
            %180 = dma.hbm_to_vmem [thread:$0]  %s1, 2048, %s178, [#allocation9]
            %s181 = smul.u32 4, 32
            %s182 = smul.u32 %s181, 1
            %s183 = sshll.u32 %s182, 4
            %184 = dma.done [#allocation9], %s183
        $region36: #{tpu_custom_call.1} parent=27 // pred_fallthru
          _
        %v185 = vld [vmem:[#allocation3] sm:$0xff]
        %v186 = vld [vmem:[#allocation3 + $0x8] sm:$0xff]
        %v187 = vld [vmem:[#allocation3 + $0x10] sm:$0xff]
        %v188 = vld [vmem:[#allocation3 + $0x18] sm:$0xff]
        %v189 = vld [vmem:[#allocation3 + $0x20] sm:$0xff]
        %v190 = vld [vmem:[#allocation3 + $0x28] sm:$0xff]
        %v191 = vld [vmem:[#allocation3 + $0x30] sm:$0xff]
        %v192 = vld [vmem:[#allocation3 + $0x38] sm:$0xff]
        %v193 = vld [vmem:[#allocation3 + $0x40] sm:$0xff]
        %v194 = vld [vmem:[#allocation3 + $0x48] sm:$0xff]
        %v195 = vld [vmem:[#allocation3 + $0x50] sm:$0xff]
        %v196 = vld [vmem:[#allocation3 + $0x58] sm:$0xff]
        %v197 = vld [vmem:[#allocation3 + $0x60] sm:$0xff]
        %v198 = vld [vmem:[#allocation3 + $0x68] sm:$0xff]
        %v199 = vld [vmem:[#allocation3 + $0x70] sm:$0xff]
        %v200 = vld [vmem:[#allocation3 + $0x78] sm:$0xff]
        %v201 = vld [vmem:[%s104] sm:$0xff]
        %v202 = vld [vmem:[%s104 + $0x8] sm:$0xff]
        %v203 = vld [vmem:[%s104 + $0x10] sm:$0xff]
        %v204 = vld [vmem:[%s104 + $0x18] sm:$0xff]
        %v205 = vld [vmem:[%s104 + $0x20] sm:$0xff]
        %v206 = vld [vmem:[%s104 + $0x28] sm:$0xff]
        %v207 = vld [vmem:[%s104 + $0x30] sm:$0xff]
        %v208 = vld [vmem:[%s104 + $0x38] sm:$0xff]
        %v209 = vld [vmem:[%s104 + $0x40] sm:$0xff]
        %v210 = vld [vmem:[%s104 + $0x48] sm:$0xff]
        %v211 = vld [vmem:[%s104 + $0x50] sm:$0xff]
        %v212 = vld [vmem:[%s104 + $0x58] sm:$0xff]
        %v213 = vld [vmem:[%s104 + $0x60] sm:$0xff]
        %v214 = vld [vmem:[%s104 + $0x68] sm:$0xff]
        %v215 = vld [vmem:[%s104 + $0x70] sm:$0xff]
        %v216 = vld [vmem:[%s104 + $0x78] sm:$0xff]
        %v217 = vld [vmem:[%s125] sm:$0x3]
        %v234 = vunpack.c.l.b16 %v201
        %v235 = vunpack.c.h.b16 %v201
        %v236 = vunpack.c.l.b16 %v202
        %v237 = vunpack.c.h.b16 %v202
        %v238 = vunpack.c.l.b16 %v203
        %v239 = vunpack.c.h.b16 %v203
        %v240 = vunpack.c.l.b16 %v204
        %v241 = vunpack.c.h.b16 %v204
        %v242 = vunpack.c.l.b16 %v205
        %v243 = vunpack.c.h.b16 %v205
        %v244 = vunpack.c.l.b16 %v206
        %v245 = vunpack.c.h.b16 %v206
        %v246 = vunpack.c.l.b16 %v207
        %v247 = vunpack.c.h.b16 %v207
        %v248 = vunpack.c.l.b16 %v208
        %v249 = vunpack.c.h.b16 %v208
        %v250 = vunpack.c.l.b16 %v209
        %v251 = vunpack.c.h.b16 %v209
        %v252 = vunpack.c.l.b16 %v210
        %v253 = vunpack.c.h.b16 %v210
        %v254 = vunpack.c.l.b16 %v211
        %v255 = vunpack.c.h.b16 %v211
        %v256 = vunpack.c.l.b16 %v212
        %v257 = vunpack.c.h.b16 %v212
        %v258 = vunpack.c.l.b16 %v213
        %v259 = vunpack.c.h.b16 %v213
        %v260 = vunpack.c.l.b16 %v214
        %v261 = vunpack.c.h.b16 %v214
        %v262 = vunpack.c.l.b16 %v215
        %v263 = vunpack.c.h.b16 %v215
        %v264 = vunpack.c.l.b16 %v216
        %v265 = vunpack.c.h.b16 %v216
        %v266 = vpack.c.b16 %v236, %v234
        %v267 = vpack.c.b16 %v237, %v235
        %v268 = vpack.c.b16 %v240, %v238
        %v269 = vpack.c.b16 %v241, %v239
        %v270 = vpack.c.b16 %v244, %v242
        %v271 = vpack.c.b16 %v245, %v243
        %v272 = vpack.c.b16 %v248, %v246
        %v273 = vpack.c.b16 %v249, %v247
        %v274 = vpack.c.b16 %v252, %v250
        %v275 = vpack.c.b16 %v253, %v251
        %v276 = vpack.c.b16 %v256, %v254
        %v277 = vpack.c.b16 %v257, %v255
        %v278 = vpack.c.b16 %v260, %v258
        %v279 = vpack.c.b16 %v261, %v259
        %v280 = vpack.c.b16 %v264, %v262
        %v281 = vpack.c.b16 %v265, %v263
        %298 = vmatprep.subr.bf16.mxu0 %v267
        %299 = vmatpush1.bf16.msra.mxu0 %v266
        %300 = vmatprep.subr.bf16.mxu0 %v269
        %301 = vmatpush1.bf16.msra.mxu0 %v268
        %302 = vmatprep.subr.bf16.mxu0 %v271
        %303 = vmatpush1.bf16.msra.mxu0 %v270
        %304 = vmatprep.subr.bf16.mxu0 %v273
        %305 = vmatpush1.bf16.msra.mxu0 %v272
        %306 = vmatprep.subr.bf16.mxu0 %v275
        %307 = vmatpush1.bf16.msra.mxu0 %v274
        %308 = vmatprep.subr.bf16.mxu0 %v277
        %309 = vmatpush1.bf16.msra.mxu0 %v276
        %310 = vmatprep.subr.bf16.mxu0 %v279
        %311 = vmatpush1.bf16.msra.mxu0 %v278
        %312 = vmatprep.subr.bf16.mxu0 %v281
        %313 = vmatpush1.bf16.msra.mxu0 %v280
        %314 = vmatprep.subr.bf16.mxu0 0
        %315 = vmatpush1.bf16.msra.mxu0 0
        %316 = vmatprep.subr.bf16.mxu0 0
        %317 = vmatpush1.bf16.msra.mxu0 0
        %318 = vmatprep.subr.bf16.mxu0 0
        %319 = vmatpush1.bf16.msra.mxu0 0
        %320 = vmatprep.subr.bf16.mxu0 0
        %321 = vmatpush1.bf16.msra.mxu0 0
        %322 = vmatprep.subr.bf16.mxu0 0
        %323 = vmatpush1.bf16.msra.mxu0 0
        %324 = vmatprep.subr.bf16.mxu0 0
        %325 = vmatpush1.bf16.msra.mxu0 0
        %326 = vmatprep.subr.bf16.mxu0 0
        %327 = vmatpush1.bf16.msra.mxu0 0
        %328 = vmatprep.subr.bf16.mxu0 0
        %329 = vmatpush1.bf16.msra.mxu0 0
        %330 = vmatprep.mubr.bf16.mxu0 0
        %331 = vmatmul.mubr.bf16.gmra.mrb[0].mxu0 %v185
        %v332 = vpop.f32.mrb[0].mxu0
        %v333 = vadd.f32 0.0, %v332
        %v334 = vpop.f32.mrb[0].mxu0
        %v335 = vadd.f32 0.0, %v334
        %v336 = vpop.f32.mrb[0].mxu0
        %v337 = vadd.f32 0.0, %v336
        %v338 = vpop.f32.mrb[0].mxu0
        %v339 = vadd.f32 0.0, %v338
        %340 = vmatprep.mubr.bf16.mxu0 0
        %341 = vmatmul.mubr.bf16.gmra.mrb[0].mxu0 %v186
        %v342 = vpop.f32.mrb[0].mxu0
        %v343 = vadd.f32 0.0, %v342
        %v344 = vpop.f32.mrb[0].mxu0
        %v345 = vadd.f32 0.0, %v344
        %v346 = vpop.f32.mrb[0].mxu0
        %v347 = vadd.f32 0.0, %v346
        %v348 = vpop.f32.mrb[0].mxu0
        %v349 = vadd.f32 0.0, %v348
        %350 = vmatprep.mubr.bf16.mxu0 0
        %351 = vmatmul.mubr.bf16.gmra.mrb[0].mxu0 %v187
        %v352 = vpop.f32.mrb[0].mxu0
        %v353 = vadd.f32 0.0, %v352
        %v354 = vpop.f32.mrb[0].mxu0
        %v355 = vadd.f32 0.0, %v354
        %v356 = vpop.f32.mrb[0].mxu0
        %v357 = vadd.f32 0.0, %v356
        %v358 = vpop.f32.mrb[0].mxu0
        %v359 = vadd.f32 0.0, %v358
        %360 = vmatprep.mubr.bf16.mxu0 0
        %361 = vmatmul.mubr.bf16.gmra.mrb[0].mxu0 %v188
        %v362 = vpop.f32.mrb[0].mxu0
        %v363 = vadd.f32 0.0, %v362
        %v364 = vpop.f32.mrb[0].mxu0
        %v365 = vadd.f32 0.0, %v364
        %v366 = vpop.f32.mrb[0].mxu0
        %v367 = vadd.f32 0.0, %v366
        %v368 = vpop.f32.mrb[0].mxu0
        %v369 = vadd.f32 0.0, %v368
        %370 = vmatprep.mubr.bf16.mxu0 0
        %371 = vmatmul.mubr.bf16.gmra.mrb[0].mxu0 %v189
        %v372 = vpop.f32.mrb[0].mxu0
        %v373 = vadd.f32 0.0, %v372
        %v374 = vpop.f32.mrb[0].mxu0
        %v375 = vadd.f32 0.0, %v374
        %v376 = vpop.f32.mrb[0].mxu0
        %v377 = vadd.f32 0.0, %v376
        %v378 = vpop.f32.mrb[0].mxu0
        %v379 = vadd.f32 0.0, %v378
        %380 = vmatprep.mubr.bf16.mxu0 0
        %381 = vmatmul.mubr.bf16.gmra.mrb[0].mxu0 %v190
        %v382 = vpop.f32.mrb[0].mxu0
        %v383 = vadd.f32 0.0, %v382
        %v384 = vpop.f32.mrb[0].mxu0
        %v385 = vadd.f32 0.0, %v384
        %v386 = vpop.f32.mrb[0].mxu0
        %v387 = vadd.f32 0.0, %v386
        %v388 = vpop.f32.mrb[0].mxu0
        %v389 = vadd.f32 0.0, %v388
        %390 = vmatprep.mubr.bf16.mxu0 0
        %391 = vmatmul.mubr.bf16.gmra.mrb[0].mxu0 %v191
        %v392 = vpop.f32.mrb[0].mxu0
        %v393 = vadd.f32 0.0, %v392
        %v394 = vpop.f32.mrb[0].mxu0
        %v395 = vadd.f32 0.0, %v394
        %v396 = vpop.f32.mrb[0].mxu0
        %v397 = vadd.f32 0.0, %v396
        %v398 = vpop.f32.mrb[0].mxu0
        %v399 = vadd.f32 0.0, %v398
        %400 = vmatprep.mubr.bf16.mxu0 0
        %401 = vmatmul.mubr.bf16.gmra.mrb[0].mxu0 %v192
        %v402 = vpop.f32.mrb[0].mxu0
        %v403 = vadd.f32 0.0, %v402
        %v404 = vpop.f32.mrb[0].mxu0
        %v405 = vadd.f32 0.0, %v404
        %v406 = vpop.f32.mrb[0].mxu0
        %v407 = vadd.f32 0.0, %v406
        %v408 = vpop.f32.mrb[0].mxu0
        %v409 = vadd.f32 0.0, %v408
        %410 = vmatprep.mubr.bf16.mxu0 0
        %411 = vmatmul.mubr.bf16.gmra.mrb[0].mxu0 %v193
        %v412 = vpop.f32.mrb[0].mxu0
        %v413 = vadd.f32 0.0, %v412
        %v414 = vpop.f32.mrb[0].mxu0
        %v415 = vadd.f32 0.0, %v414
        %v416 = vpop.f32.mrb[0].mxu0
        %v417 = vadd.f32 0.0, %v416
        %v418 = vpop.f32.mrb[0].mxu0
        %v419 = vadd.f32 0.0, %v418
        %420 = vmatprep.mubr.bf16.mxu0 0
        %421 = vmatmul.mubr.bf16.gmra.mrb[0].mxu0 %v194
        %v422 = vpop.f32.mrb[0].mxu0
        %v423 = vadd.f32 0.0, %v422
        %v424 = vpop.f32.mrb[0].mxu0
        %v425 = vadd.f32 0.0, %v424
        %v426 = vpop.f32.mrb[0].mxu0
        %v427 = vadd.f32 0.0, %v426
        %v428 = vpop.f32.mrb[0].mxu0
        %v429 = vadd.f32 0.0, %v428
        %430 = vmatprep.mubr.bf16.mxu0 0
        %431 = vmatmul.mubr.bf16.gmra.mrb[0].mxu0 %v195
        %v432 = vpop.f32.mrb[0].mxu0
        %v433 = vadd.f32 0.0, %v432
        %v434 = vpop.f32.mrb[0].mxu0
        %v435 = vadd.f32 0.0, %v434
        %v436 = vpop.f32.mrb[0].mxu0
        %v437 = vadd.f32 0.0, %v436
        %v438 = vpop.f32.mrb[0].mxu0
        %v439 = vadd.f32 0.0, %v438
        %440 = vmatprep.mubr.bf16.mxu0 0
        %441 = vmatmul.mubr.bf16.gmra.mrb[0].mxu0 %v196
        %v442 = vpop.f32.mrb[0].mxu0
        %v443 = vadd.f32 0.0, %v442
        %v444 = vpop.f32.mrb[0].mxu0
        %v445 = vadd.f32 0.0, %v444
        %v446 = vpop.f32.mrb[0].mxu0
        %v447 = vadd.f32 0.0, %v446
        %v448 = vpop.f32.mrb[0].mxu0
        %v449 = vadd.f32 0.0, %v448
        %450 = vmatprep.mubr.bf16.mxu0 0
        %451 = vmatmul.mubr.bf16.gmra.mrb[0].mxu0 %v197
        %v452 = vpop.f32.mrb[0].mxu0
        %v453 = vadd.f32 0.0, %v452
        %v454 = vpop.f32.mrb[0].mxu0
        %v455 = vadd.f32 0.0, %v454
        %v456 = vpop.f32.mrb[0].mxu0
        %v457 = vadd.f32 0.0, %v456
        %v458 = vpop.f32.mrb[0].mxu0
        %v459 = vadd.f32 0.0, %v458
        %460 = vmatprep.mubr.bf16.mxu0 0
        %461 = vmatmul.mubr.bf16.gmra.mrb[0].mxu0 %v198
        %v462 = vpop.f32.mrb[0].mxu0
        %v463 = vadd.f32 0.0, %v462
        %v464 = vpop.f32.mrb[0].mxu0
        %v465 = vadd.f32 0.0, %v464
        %v466 = vpop.f32.mrb[0].mxu0
        %v467 = vadd.f32 0.0, %v466
        %v468 = vpop.f32.mrb[0].mxu0
        %v469 = vadd.f32 0.0, %v468
        %470 = vmatprep.mubr.bf16.mxu0 0
        %471 = vmatmul.mubr.bf16.gmra.mrb[0].mxu0 %v199
        %v472 = vpop.f32.mrb[0].mxu0
        %v473 = vadd.f32 0.0, %v472
        %v474 = vpop.f32.mrb[0].mxu0
        %v475 = vadd.f32 0.0, %v474
        %v476 = vpop.f32.mrb[0].mxu0
        %v477 = vadd.f32 0.0, %v476
        %v478 = vpop.f32.mrb[0].mxu0
        %v479 = vadd.f32 0.0, %v478
        %480 = vmatprep.mubr.bf16.mxu0 0
        %481 = vmatmul.mubr.bf16.gmra.mrb[0].mxu0 %v200
        %v482 = vpop.f32.mrb[0].mxu0
        %v483 = vadd.f32 0.0, %v482
        %v484 = vpop.f32.mrb[0].mxu0
        %v485 = vadd.f32 0.0, %v484
        %v486 = vpop.f32.mrb[0].mxu0
        %v487 = vadd.f32 0.0, %v486
        %v488 = vpop.f32.mrb[0].mxu0
        %v489 = vadd.f32 0.0, %v488
        %490 = vdwg.mxu0
        %v491 = vpack.c.bf16 %v337, %v333
        %v492 = vpack.c.bf16 %v347, %v343
        %v493 = vpack.c.bf16 %v357, %v353
        %v494 = vpack.c.bf16 %v367, %v363
        %v495 = vpack.c.bf16 %v377, %v373
        %v496 = vpack.c.bf16 %v387, %v383
        %v497 = vpack.c.bf16 %v397, %v393
        %v498 = vpack.c.bf16 %v407, %v403
        %v499 = vpack.c.bf16 %v417, %v413
        %v500 = vpack.c.bf16 %v427, %v423
        %v501 = vpack.c.bf16 %v437, %v433
        %v502 = vpack.c.bf16 %v447, %v443
        %v503 = vpack.c.bf16 %v457, %v453
        %v504 = vpack.c.bf16 %v467, %v463
        %v505 = vpack.c.bf16 %v477, %v473
        %v506 = vpack.c.bf16 %v487, %v483
        %v507 = vld [vmem:[#allocation2] sm:$0xff]
        %v508 = vld [vmem:[#allocation2 + $0x8] sm:$0xff]
        %v509 = vld [vmem:[#allocation2 + $0x10] sm:$0xff]
        %v510 = vld [vmem:[#allocation2 + $0x18] sm:$0xff]
        %v511 = vld [vmem:[#allocation2 + $0x20] sm:$0xff]
        %v512 = vld [vmem:[#allocation2 + $0x28] sm:$0xff]
        %v513 = vld [vmem:[#allocation2 + $0x30] sm:$0xff]
        %v514 = vld [vmem:[#allocation2 + $0x38] sm:$0xff]
        %v515 = vld [vmem:[#allocation2 + $0x40] sm:$0xff]
        %v516 = vld [vmem:[#allocation2 + $0x48] sm:$0xff]
        %v517 = vld [vmem:[#allocation2 + $0x50] sm:$0xff]
        %v518 = vld [vmem:[#allocation2 + $0x58] sm:$0xff]
        %v519 = vld [vmem:[#allocation2 + $0x60] sm:$0xff]
        %v520 = vld [vmem:[#allocation2 + $0x68] sm:$0xff]
        %v521 = vld [vmem:[#allocation2 + $0x70] sm:$0xff]
        %v522 = vld [vmem:[#allocation2 + $0x78] sm:$0xff]
        %v523 = vld [vmem:[#allocation2 + $0x80] sm:$0xff]
        %v524 = vld [vmem:[#allocation2 + $0x88] sm:$0xff]
        %v525 = vld [vmem:[#allocation2 + $0x90] sm:$0xff]
        %v526 = vld [vmem:[#allocation2 + $0x98] sm:$0xff]
        %v527 = vld [vmem:[#allocation2 + $0xa0] sm:$0xff]
        %v528 = vld [vmem:[#allocation2 + $0xa8] sm:$0xff]
        %v529 = vld [vmem:[#allocation2 + $0xb0] sm:$0xff]
        %v530 = vld [vmem:[#allocation2 + $0xb8] sm:$0xff]
        %v531 = vld [vmem:[#allocation2 + $0xc0] sm:$0xff]
        %v532 = vld [vmem:[#allocation2 + $0xc8] sm:$0xff]
        %v533 = vld [vmem:[#allocation2 + $0xd0] sm:$0xff]
        %v534 = vld [vmem:[#allocation2 + $0xd8] sm:$0xff]
        %v535 = vld [vmem:[#allocation2 + $0xe0] sm:$0xff]
        %v536 = vld [vmem:[#allocation2 + $0xe8] sm:$0xff]
        %v537 = vld [vmem:[#allocation2 + $0xf0] sm:$0xff]
        %v538 = vld [vmem:[#allocation2 + $0xf8] sm:$0xff]
        %539 = vmatprep.subr.bf16.mxu0 0
        %540 = vmatpush1.bf16.msra.mxu0 %v491
        %541 = vmatprep.subr.bf16.mxu0 0
        %542 = vmatpush1.bf16.msra.mxu0 %v492
        %543 = vmatprep.subr.bf16.mxu0 0
        %544 = vmatpush1.bf16.msra.mxu0 %v493
        %545 = vmatprep.subr.bf16.mxu0 0
        %546 = vmatpush1.bf16.msra.mxu0 %v494
        %547 = vmatprep.subr.bf16.mxu0 0
        %548 = vmatpush1.bf16.msra.mxu0 %v495
        %549 = vmatprep.subr.bf16.mxu0 0
        %550 = vmatpush1.bf16.msra.mxu0 %v496
        %551 = vmatprep.subr.bf16.mxu0 0
        %552 = vmatpush1.bf16.msra.mxu0 %v497
        %553 = vmatprep.subr.bf16.mxu0 0
        %554 = vmatpush1.bf16.msra.mxu0 %v498
        %555 = vmatprep.subr.bf16.mxu0 0
        %556 = vmatpush1.bf16.msra.mxu0 %v499
        %557 = vmatprep.subr.bf16.mxu0 0
        %558 = vmatpush1.bf16.msra.mxu0 %v500
        %559 = vmatprep.subr.bf16.mxu0 0
        %560 = vmatpush1.bf16.msra.mxu0 %v501
        %561 = vmatprep.subr.bf16.mxu0 0
        %562 = vmatpush1.bf16.msra.mxu0 %v502
        %563 = vmatprep.subr.bf16.mxu0 0
        %564 = vmatpush1.bf16.msra.mxu0 %v503
        %565 = vmatprep.subr.bf16.mxu0 0
        %566 = vmatpush1.bf16.msra.mxu0 %v504
        %567 = vmatprep.subr.bf16.mxu0 0
        %568 = vmatpush1.bf16.msra.mxu0 %v505
        %569 = vmatprep.subr.bf16.mxu0 0
        %570 = vmatpush1.bf16.msra.mxu0 %v506
        %571 = vmatprep.mubr.bf16.mxu0 %v508
        %572 = vmatmul.mubr.bf16.gmra.mrb[0].mxu0 %v507
        %v573 = vpop.f32.mrb[0].mxu0
        %v574 = vadd.f32 %v335, %v573
        %v575 = vpop.f32.mrb[0].mxu0
        %v576 = vpop.f32.mrb[0].mxu0
        %v577 = vadd.f32 %v339, %v576
        %v578 = vpop.f32.mrb[0].mxu0
        %579 = vmatprep.mubr.bf16.mxu0 %v510
        %580 = vmatmul.mubr.bf16.gmra.mrb[0].mxu0 %v509
        %v581 = vpop.f32.mrb[0].mxu0
        %v582 = vadd.f32 %v345, %v581
        %v583 = vpop.f32.mrb[0].mxu0
        %v584 = vpop.f32.mrb[0].mxu0
        %v585 = vadd.f32 %v349, %v584
        %v586 = vpop.f32.mrb[0].mxu0
        %587 = vmatprep.mubr.bf16.mxu0 %v512
        %588 = vmatmul.mubr.bf16.gmra.mrb[0].mxu0 %v511
        %v589 = vpop.f32.mrb[0].mxu0
        %v590 = vadd.f32 %v355, %v589
        %v591 = vpop.f32.mrb[0].mxu0
        %v592 = vpop.f32.mrb[0].mxu0
        %v593 = vadd.f32 %v359, %v592
        %v594 = vpop.f32.mrb[0].mxu0
        %595 = vmatprep.mubr.bf16.mxu0 %v514
        %596 = vmatmul.mubr.bf16.gmra.mrb[0].mxu0 %v513
        %v597 = vpop.f32.mrb[0].mxu0
        %v598 = vadd.f32 %v365, %v597
        %v599 = vpop.f32.mrb[0].mxu0
        %v600 = vpop.f32.mrb[0].mxu0
        %v601 = vadd.f32 %v369, %v600
        %v602 = vpop.f32.mrb[0].mxu0
        %603 = vmatprep.mubr.bf16.mxu0 %v516
        %604 = vmatmul.mubr.bf16.gmra.mrb[0].mxu0 %v515
        %v605 = vpop.f32.mrb[0].mxu0
        %v606 = vadd.f32 %v375, %v605
        %v607 = vpop.f32.mrb[0].mxu0
        %v608 = vpop.f32.mrb[0].mxu0
        %v609 = vadd.f32 %v379, %v608
        %v610 = vpop.f32.mrb[0].mxu0
        %611 = vmatprep.mubr.bf16.mxu0 %v518
        %612 = vmatmul.mubr.bf16.gmra.mrb[0].mxu0 %v517
        %v613 = vpop.f32.mrb[0].mxu0
        %v614 = vadd.f32 %v385, %v613
        %v615 = vpop.f32.mrb[0].mxu0
        %v616 = vpop.f32.mrb[0].mxu0
        %v617 = vadd.f32 %v389, %v616
        %v618 = vpop.f32.mrb[0].mxu0
        %619 = vmatprep.mubr.bf16.mxu0 %v520
        %620 = vmatmul.mubr.bf16.gmra.mrb[0].mxu0 %v519
        %v621 = vpop.f32.mrb[0].mxu0
        %v622 = vadd.f32 %v395, %v621
        %v623 = vpop.f32.mrb[0].mxu0
        %v624 = vpop.f32.mrb[0].mxu0
        %v625 = vadd.f32 %v399, %v624
        %v626 = vpop.f32.mrb[0].mxu0
        %627 = vmatprep.mubr.bf16.mxu0 %v522
        %628 = vmatmul.mubr.bf16.gmra.mrb[0].mxu0 %v521
        %v629 = vpop.f32.mrb[0].mxu0
        %v630 = vadd.f32 %v405, %v629
        %v631 = vpop.f32.mrb[0].mxu0
        %v632 = vpop.f32.mrb[0].mxu0
        %v633 = vadd.f32 %v409, %v632
        %v634 = vpop.f32.mrb[0].mxu0
        %635 = vmatprep.mubr.bf16.mxu0 %v524
        %636 = vmatmul.mubr.bf16.gmra.mrb[0].mxu0 %v523
        %v637 = vpop.f32.mrb[0].mxu0
        %v638 = vadd.f32 %v415, %v637
        %v639 = vpop.f32.mrb[0].mxu0
        %v640 = vpop.f32.mrb[0].mxu0
        %v641 = vadd.f32 %v419, %v640
        %v642 = vpop.f32.mrb[0].mxu0
        %643 = vmatprep.mubr.bf16.mxu0 %v526
        %644 = vmatmul.mubr.bf16.gmra.mrb[0].mxu0 %v525
        %v645 = vpop.f32.mrb[0].mxu0
        %v646 = vadd.f32 %v425, %v645
        %v647 = vpop.f32.mrb[0].mxu0
        %v648 = vpop.f32.mrb[0].mxu0
        %v649 = vadd.f32 %v429, %v648
        %v650 = vpop.f32.mrb[0].mxu0
        %651 = vmatprep.mubr.bf16.mxu0 %v528
        %652 = vmatmul.mubr.bf16.gmra.mrb[0].mxu0 %v527
        %v653 = vpop.f32.mrb[0].mxu0
        %v654 = vadd.f32 %v435, %v653
        %v655 = vpop.f32.mrb[0].mxu0
        %v656 = vpop.f32.mrb[0].mxu0
        %v657 = vadd.f32 %v439, %v656
        %v658 = vpop.f32.mrb[0].mxu0
        %659 = vmatprep.mubr.bf16.mxu0 %v530
        %660 = vmatmul.mubr.bf16.gmra.mrb[0].mxu0 %v529
        %v661 = vpop.f32.mrb[0].mxu0
        %v662 = vadd.f32 %v445, %v661
        %v663 = vpop.f32.mrb[0].mxu0
        %v664 = vpop.f32.mrb[0].mxu0
        %v665 = vadd.f32 %v449, %v664
        %v666 = vpop.f32.mrb[0].mxu0
        %667 = vmatprep.mubr.bf16.mxu0 %v532
        %668 = vmatmul.mubr.bf16.gmra.mrb[0].mxu0 %v531
        %v669 = vpop.f32.mrb[0].mxu0
        %v670 = vadd.f32 %v455, %v669
        %v671 = vpop.f32.mrb[0].mxu0
        %v672 = vpop.f32.mrb[0].mxu0
        %v673 = vadd.f32 %v459, %v672
        %v674 = vpop.f32.mrb[0].mxu0
        %675 = vmatprep.mubr.bf16.mxu0 %v534
        %676 = vmatmul.mubr.bf16.gmra.mrb[0].mxu0 %v533
        %v677 = vpop.f32.mrb[0].mxu0
        %v678 = vadd.f32 %v465, %v677
        %v679 = vpop.f32.mrb[0].mxu0
        %v680 = vpop.f32.mrb[0].mxu0
        %v681 = vadd.f32 %v469, %v680
        %v682 = vpop.f32.mrb[0].mxu0
        %683 = vmatprep.mubr.bf16.mxu0 %v536
        %684 = vmatmul.mubr.bf16.gmra.mrb[0].mxu0 %v535
        %v685 = vpop.f32.mrb[0].mxu0
        %v686 = vadd.f32 %v475, %v685
        %v687 = vpop.f32.mrb[0].mxu0
        %v688 = vpop.f32.mrb[0].mxu0
        %v689 = vadd.f32 %v479, %v688
        %v690 = vpop.f32.mrb[0].mxu0
        %691 = vmatprep.mubr.bf16.mxu0 %v538
        %692 = vmatmul.mubr.bf16.gmra.mrb[0].mxu0 %v537
        %v693 = vpop.f32.mrb[0].mxu0
        %v694 = vadd.f32 %v485, %v693
        %v695 = vpop.f32.mrb[0].mxu0
        %v696 = vpop.f32.mrb[0].mxu0
        %v697 = vadd.f32 %v489, %v696
        %v698 = vpop.f32.mrb[0].mxu0
        %699 = vdwg.mxu0
        %v700 = vlaneseq
        %v701 = vshrl.u32 %v700, 7
        %v702 = vsub.s32 0, %v701
        %v703 = vrot.slane %v217, %v702
        %v704 = vmul.f32 %v574, %v703
        %v705 = vmul.f32 %v577, %v703
        %v706 = vmul.f32 %v582, %v703
        %v707 = vmul.f32 %v585, %v703
        %v708 = vmul.f32 %v590, %v703
        %v709 = vmul.f32 %v593, %v703
        %v710 = vmul.f32 %v598, %v703
        %v711 = vmul.f32 %v601, %v703
        %v712 = vmul.f32 %v606, %v703
        %v713 = vmul.f32 %v609, %v703
        %v714 = vmul.f32 %v614, %v703
        %v715 = vmul.f32 %v617, %v703
        %v716 = vmul.f32 %v622, %v703
        %v717 = vmul.f32 %v625, %v703
        %v718 = vmul.f32 %v630, %v703
        %v719 = vmul.f32 %v633, %v703
        %v720 = vmul.f32 %v638, %v703
        %v721 = vmul.f32 %v641, %v703
        %v722 = vmul.f32 %v646, %v703
        %v723 = vmul.f32 %v649, %v703
        %v724 = vmul.f32 %v654, %v703
        %v725 = vmul.f32 %v657, %v703
        %v726 = vmul.f32 %v662, %v703
        %v727 = vmul.f32 %v665, %v703
        %v728 = vmul.f32 %v670, %v703
        %v729 = vmul.f32 %v673, %v703
        %v730 = vmul.f32 %v678, %v703
        %v731 = vmul.f32 %v681, %v703
        %v732 = vmul.f32 %v686, %v703
        %v733 = vmul.f32 %v689, %v703
        %v734 = vmul.f32 %v694, %v703
        %v735 = vmul.f32 %v697, %v703
        %v736 = vlaneseq
        %v737 = vshrl.u32 %v736, 7
        %v738 = vsub.s32 1, %v737
        %v739 = vrot.slane %v217, %v738
        %v740 = vadd.f32 %v704, %v739
        %v741 = vadd.f32 %v705, %v739
        %v742 = vadd.f32 %v706, %v739
        %v743 = vadd.f32 %v707, %v739
        %v744 = vadd.f32 %v708, %v739
        %v745 = vadd.f32 %v709, %v739
        %v746 = vadd.f32 %v710, %v739
        %v747 = vadd.f32 %v711, %v739
        %v748 = vadd.f32 %v712, %v739
        %v749 = vadd.f32 %v713, %v739
        %v750 = vadd.f32 %v714, %v739
        %v751 = vadd.f32 %v715, %v739
        %v752 = vadd.f32 %v716, %v739
        %v753 = vadd.f32 %v717, %v739
        %v754 = vadd.f32 %v718, %v739
        %v755 = vadd.f32 %v719, %v739
        %v756 = vadd.f32 %v720, %v739
        %v757 = vadd.f32 %v721, %v739
        %v758 = vadd.f32 %v722, %v739
        %v759 = vadd.f32 %v723, %v739
        %v760 = vadd.f32 %v724, %v739
        %v761 = vadd.f32 %v725, %v739
        %v762 = vadd.f32 %v726, %v739
        %v763 = vadd.f32 %v727, %v739
        %v764 = vadd.f32 %v728, %v739
        %v765 = vadd.f32 %v729, %v739
        %v766 = vadd.f32 %v730, %v739
        %v767 = vadd.f32 %v731, %v739
        %v768 = vadd.f32 %v732, %v739
        %v769 = vadd.f32 %v733, %v739
        %v770 = vadd.f32 %v734, %v739
        %v771 = vadd.f32 %v735, %v739
        %p772 = scmp.lt.s32.totalorder %s18, 2
        // Predicated region
        $region43: #{tpu_custom_call.1} parent=27 // pred_check
          %p773 = pneg %p772
        $region44: #{tpu_custom_call.1} parent=27 // pred_check_branch
          %775 = sbr.rel (%p773) target = $region46
        $region45: #{tpu_custom_call.1} parent=27 // pred_region
          %v776 = vmax.f32 %v740, 0.0
          %v777 = vmax.f32 %v741, 0.0
          %v778 = vmax.f32 %v742, 0.0
          %v779 = vmax.f32 %v743, 0.0
          %v780 = vmax.f32 %v744, 0.0
          %v781 = vmax.f32 %v745, 0.0
          %v782 = vmax.f32 %v746, 0.0
          %v783 = vmax.f32 %v747, 0.0
          %v784 = vmax.f32 %v748, 0.0
          %v785 = vmax.f32 %v749, 0.0
          %v786 = vmax.f32 %v750, 0.0
          %v787 = vmax.f32 %v751, 0.0
          %v788 = vmax.f32 %v752, 0.0
          %v789 = vmax.f32 %v753, 0.0
          %v790 = vmax.f32 %v754, 0.0
          %v791 = vmax.f32 %v755, 0.0
          %v792 = vmax.f32 %v756, 0.0
          %v793 = vmax.f32 %v757, 0.0
          %v794 = vmax.f32 %v758, 0.0
          %v795 = vmax.f32 %v759, 0.0
          %v796 = vmax.f32 %v760, 0.0
          %v797 = vmax.f32 %v761, 0.0
          %v798 = vmax.f32 %v762, 0.0
          %v799 = vmax.f32 %v763, 0.0
          %v800 = vmax.f32 %v764, 0.0
          %v801 = vmax.f32 %v765, 0.0
          %v802 = vmax.f32 %v766, 0.0
          %v803 = vmax.f32 %v767, 0.0
          %v804 = vmax.f32 %v768, 0.0
          %v805 = vmax.f32 %v769, 0.0
          %v806 = vmax.f32 %v770, 0.0
          %v807 = vmax.f32 %v771, 0.0
          %v808 = vpack.c.bf16 %v777, %v776
          %v809 = vpack.c.bf16 %v779, %v778
          %v810 = vpack.c.bf16 %v781, %v780
          %v811 = vpack.c.bf16 %v783, %v782
          %v812 = vpack.c.bf16 %v785, %v784
          %v813 = vpack.c.bf16 %v787, %v786
          %v814 = vpack.c.bf16 %v789, %v788
          %v815 = vpack.c.bf16 %v791, %v790
          %v816 = vpack.c.bf16 %v793, %v792
          %v817 = vpack.c.bf16 %v795, %v794
          %v818 = vpack.c.bf16 %v797, %v796
          %v819 = vpack.c.bf16 %v799, %v798
          %v820 = vpack.c.bf16 %v801, %v800
          %v821 = vpack.c.bf16 %v803, %v802
          %v822 = vpack.c.bf16 %v805, %v804
          %v823 = vpack.c.bf16 %v807, %v806
          %824 = vst [vmem:[#allocation3] sm:$0xff] %v808
          %825 = vst [vmem:[#allocation3 + $0x8] sm:$0xff] %v809
          %826 = vst [vmem:[#allocation3 + $0x10] sm:$0xff] %v810
          %827 = vst [vmem:[#allocation3 + $0x18] sm:$0xff] %v811
          %828 = vst [vmem:[#allocation3 + $0x20] sm:$0xff] %v812
          %829 = vst [vmem:[#allocation3 + $0x28] sm:$0xff] %v813
          %830 = vst [vmem:[#allocation3 + $0x30] sm:$0xff] %v814
          %831 = vst [vmem:[#allocation3 + $0x38] sm:$0xff] %v815
          %832 = vst [vmem:[#allocation3 + $0x40] sm:$0xff] %v816
          %833 = vst [vmem:[#allocation3 + $0x48] sm:$0xff] %v817
          %834 = vst [vmem:[#allocation3 + $0x50] sm:$0xff] %v818
          %835 = vst [vmem:[#allocation3 + $0x58] sm:$0xff] %v819
          %836 = vst [vmem:[#allocation3 + $0x60] sm:$0xff] %v820
          %837 = vst [vmem:[#allocation3 + $0x68] sm:$0xff] %v821
          %838 = vst [vmem:[#allocation3 + $0x70] sm:$0xff] %v822
          %839 = vst [vmem:[#allocation3 + $0x78] sm:$0xff] %v823
        $region46: #{tpu_custom_call.1} parent=27 // pred_fallthru
          _
        %p840 = scmp.eq.s32.totalorder %s18, 2
        // Predicated region
        $region47: #{tpu_custom_call.1} parent=27 // pred_check
          %p841 = pneg %p840
        $region48: #{tpu_custom_call.1} parent=27 // pred_check_branch
          %843 = sbr.rel (%p841) target = $region50
        $region49: #{tpu_custom_call.1} parent=27 // pred_region
          %v844 = vpack.c.bf16 %v741, %v740
          %v845 = vpack.c.bf16 %v743, %v742
          %v846 = vpack.c.bf16 %v745, %v744
          %v847 = vpack.c.bf16 %v747, %v746
          %v848 = vpack.c.bf16 %v749, %v748
          %v849 = vpack.c.bf16 %v751, %v750
          %v850 = vpack.c.bf16 %v753, %v752
          %v851 = vpack.c.bf16 %v755, %v754
          %v852 = vpack.c.bf16 %v757, %v756
          %v853 = vpack.c.bf16 %v759, %v758
          %v854 = vpack.c.bf16 %v761, %v760
          %v855 = vpack.c.bf16 %v763, %v762
          %v856 = vpack.c.bf16 %v765, %v764
          %v857 = vpack.c.bf16 %v767, %v766
          %v858 = vpack.c.bf16 %v769, %v768
          %v859 = vpack.c.bf16 %v771, %v770
          %860 = vst [vmem:[#allocation3] sm:$0xff] %v844
          %861 = vst [vmem:[#allocation3 + $0x8] sm:$0xff] %v845
          %862 = vst [vmem:[#allocation3 + $0x10] sm:$0xff] %v846
          %863 = vst [vmem:[#allocation3 + $0x18] sm:$0xff] %v847
          %864 = vst [vmem:[#allocation3 + $0x20] sm:$0xff] %v848
          %865 = vst [vmem:[#allocation3 + $0x28] sm:$0xff] %v849
          %866 = vst [vmem:[#allocation3 + $0x30] sm:$0xff] %v850
          %867 = vst [vmem:[#allocation3 + $0x38] sm:$0xff] %v851
          %868 = vst [vmem:[#allocation3 + $0x40] sm:$0xff] %v852
          %869 = vst [vmem:[#allocation3 + $0x48] sm:$0xff] %v853
          %870 = vst [vmem:[#allocation3 + $0x50] sm:$0xff] %v854
          %871 = vst [vmem:[#allocation3 + $0x58] sm:$0xff] %v855
          %872 = vst [vmem:[#allocation3 + $0x60] sm:$0xff] %v856
          %873 = vst [vmem:[#allocation3 + $0x68] sm:$0xff] %v857
          %874 = vst [vmem:[#allocation3 + $0x70] sm:$0xff] %v858
          %875 = vst [vmem:[#allocation3 + $0x78] sm:$0xff] %v859
          $region51: #{tpu_custom_call.1} parent=49
            #allocation14 [shape = 's32[1]{0}', space=sflag, size = 0x4, scoped, tag = 'scoped memory for tpu_custom_call.1']
            // Predicated region
            $region52: #{tpu_custom_call.1} parent=51 // pred_check
              _
            $region53: #{tpu_custom_call.1} parent=51 // pred_check_branch
              %877 = sbr.rel target = $region55
            $region54: #{tpu_custom_call.1} parent=51 // pred_region
              %878 = sst [smem:[#allocation12]] [#allocation16]
              %879 = sst [smem:[#allocation13]] [#allocation15]
            $region55: #{tpu_custom_call.1} parent=51 // pred_fallthru
              _
            %881 = shalt.err (0)
            %s883 = sshll.u32 [#allocation3], 4
            %s884 = int_to_ptr.vmem [resolvable:$true] %s883
            %886 = dma.vmem_to_hbm [thread:$0]  %s884, 2048, %s4, [#allocation14]
            %s887 = smul.u32 4, 32
            %s888 = smul.u32 %s887, 1
            %s889 = sshll.u32 %s888, 4
            %890 = dma.done [#allocation14], %s889
        $region50: #{tpu_custom_call.1} parent=27 // pred_fallthru
          _
      $region28: #{tpu_custom_call.1} parent=5 // pred_fallthru
        _
    $region6: #{tpu_custom_call.1} parent=1 // loop_footer
      %s17 = sadd.s32 1, %s13
    $region7: #{tpu_custom_call.1} parent=1 // loop_footer_branch
      %12 = sbr.rel target = $region3
    $region8: #{tpu_custom_call.1} parent=1 // loop_exit
      _
    %891 = vsyncpa [#allocation5], 1
    %s892 = scalar_lea.sflag [#allocation5], 1
    %893 = vsyncpa %s892, 1

</llo_original>
